<compile_context>
chip_gen: v7x
topology: tpu7x:2x2x1
jax: 0.10.0
libtpu: 0.0.40
codegen_flags: <defaults>
</compile_context>

<pallas_src>
import jax
import jax.numpy as jnp
from jax.experimental import pallas as pl
from jax.experimental.pallas import tpu as pltpu


def _flatten_copy_kernel(x_ref, o_ref):
    # Pure copy of one lane-dense tile.
    o_ref[...] = x_ref[...]


def _tile_budget_bytes():
    """Return (target tile bytes, vmem limit bytes) per chip generation."""
    kind = ""
    try:
        kind = jax.devices()[0].device_kind.lower()
    except Exception:
        pass
    if "v7" in kind or "7x" in kind:
        # 3.2 TB/s HBM: big tiles amortize the ~0.35 us per-step overhead.
        # 4 live buffers * 8 MiB = 32 MiB resident, fits 64 MiB physical VMEM.
        return 8 * 1024 * 1024, 40 * 1024 * 1024
    if "v6" in kind:
        # ~1.4 TB/s HBM; 4 MiB tiles, 16 MiB resident, well under limits.
        return 4 * 1024 * 1024, 24 * 1024 * 1024
    # v5e (~820 GB/s) and anything unknown: 2-4 MiB tiles are already fine.
    return 4 * 1024 * 1024, 24 * 1024 * 1024


def _pick_tile(dim: int, align: int, cap: int) -> int:
    """Tile size for `dim`: full extent if dim <= align; else prefer the
    largest multiple of `align` <= cap that divides `dim`; else the largest
    aligned value <= cap (pl.cdiv then creates a single masked edge block)."""
    if dim <= align:
        return dim
    cap = max(align, min(dim, cap))
    best_div = 0
    t = align
    while t <= cap:
        if dim % t == 0:
            best_div = t
        t += align
    if best_div:
        return best_div
    return (cap // align) * align


def _pick_slab_lanes(total: int, itemsize: int, target_bytes: int, sublane: int):
    """Largest multiple of 128 that divides `total` and keeps a minimum-height
    (sublane-row) block within the byte budget.  None if total % 128 != 0."""
    if total % 128 != 0:
        return None
    cap = max(128, target_bytes // (sublane * itemsize))
    cap = min(cap, total)
    best = 128
    t = 128
    while t <= cap:
        if total % t == 0:
            best = t
        t += 128
    return best


def flatten_forward(x: jax.Array, *, materialize: bool = False) -> jax.Array:
    """Equivalent of torch `x.view(x.shape[0], -1)` for a contiguous input.

    Default is the metadata-only reshape (no kernel launch, no HBM traffic).
    `materialize=True` runs the Pallas copy kernel, which exists only as an
    explicit materialization / fusion site for downstream ops.
    """
    n = x.shape[0]
    feat = 1
    for d in x.shape[1:]:
        feat *= d

    if not materialize:
        # Flatten is metadata-only: this matches torch .view(N, -1) exactly.
        return x.reshape(n, feat)

    itemsize = jnp.dtype(x.dtype).itemsize
    sublane = {4: 8, 2: 16, 1: 32}.get(itemsize, 8)
    target_bytes, vmem_limit = _tile_budget_bytes()

    total = n * feat
    lanes = _pick_slab_lanes(total, itemsize, target_bytes, sublane)

    if lanes is not None:
        # Preferred path: tile a flat lane-dense slab (rows, lanes).
        rows = total // lanes
        row_cap = max(1, target_bytes // max(1, lanes * itemsize))
        tr = _pick_tile(rows, sublane, row_cap)
        grid = (pl.cdiv(rows, tr),)

        slab = x.reshape(rows, lanes)           # metadata-only
        out_slab = pl.pallas_call(
            _flatten_copy_kernel,
            out_shape=jax.ShapeDtypeStruct((rows, lanes), x.dtype),
            grid_spec=pltpu.PrefetchScalarGridSpec(
                num_scalar_prefetch=0,
                grid=grid,
                in_specs=[pl.BlockSpec((tr, lanes), lambda i: (i, 0))],
                out_specs=pl.BlockSpec((tr, lanes), lambda i: (i, 0)),
            ),
            compiler_params=pltpu.CompilerParams(
                dimension_semantics=("parallel",),
                vmem_limit_bytes=vmem_limit,
            ),
            cost_estimate=pl.CostEstimate(
                flops=0,
                transcendentals=0,
                bytes_accessed=2 * total * itemsize,
            ),
        )(slab)
        return out_slab.reshape(n, feat)        # metadata-only

    # Fallback (total not a multiple of 128): tile the (n, feat) view directly.
    x2d = x.reshape(n, feat)
    lane_cap = max(128, target_bytes // (sublane * itemsize))
    tf = _pick_tile(feat, 128, lane_cap)
    row_cap = max(1, target_bytes // max(1, tf * itemsize))
    tn = _pick_tile(n, sublane, row_cap)
    grid = (pl.cdiv(n, tn), pl.cdiv(feat, tf))

    return pl.pallas_call(
        _flatten_copy_kernel,
        out_shape=jax.ShapeDtypeStruct((n, feat), x.dtype),
        grid_spec=pltpu.PrefetchScalarGridSpec(
            num_scalar_prefetch=0,
            grid=grid,
            in_specs=[pl.BlockSpec((tn, tf), lambda i, j: (i, j))],
            out_specs=pl.BlockSpec((tn, tf), lambda i, j: (i, j)),
        ),
        compiler_params=pltpu.CompilerParams(
            dimension_semantics=("parallel", "parallel"),
            vmem_limit_bytes=vmem_limit,
        ),
        cost_estimate=pl.CostEstimate(
            flops=0,
            transcendentals=0,
            bytes_accessed=2 * total * itemsize,
        ),
    )(x2d)


if __name__ == "__main__":
    key = jax.random.PRNGKey(0)
    # Small NCHW input, consistent with a conv-style feature map.
    x = jax.random.normal(key, (2, 4, 16, 16), dtype=jnp.float32)
    ref = x.reshape(x.shape[0], -1)

    # Default (recommended) path: metadata-only, no kernel launch.
    out_view = jax.block_until_ready(flatten_forward(x))
    assert out_view.shape == (2, 4 * 16 * 16), out_view.shape
    assert jnp.array_equal(out_view, ref), "flatten (view) mismatch"

    # Explicitly materialized path: exercises the Pallas copy kernel once.
    out = jax.block_until_ready(flatten_forward(x, materialize=True))
    assert out.shape == (2, 4 * 16 * 16), out.shape
    assert out.dtype == x.dtype
    assert jnp.array_equal(out, ref), "flatten (materialized) mismatch"

    print("KERNEL_OK")
</pallas_src>

<mosaic_0001>
module attributes {stable_mosaic.version = 11 : i64} {
  func.func @_flatten_copy_kernel(%arg0: i32, %arg1: memref<1x2048xf32, #tpu.memory_space<vmem>>, %arg2: memref<1x2048xf32, #tpu.memory_space<vmem>>) attributes {dimension_semantics = [#tpu.dimension_semantics<parallel>], iteration_bounds = array<i64: 1>, scalar_prefetch = 0 : i64, scratch_operands = 0 : i64, tpu.core_type = #tpu.core_type<tc>, window_params = [{transform_indices = @transform_0, window_bounds = array<i64: 1, 2048>}, {transform_indices = @transform_1, window_bounds = array<i64: 1, 2048>}]} {
    %c0 = arith.constant 0 : index
    %c0_0 = arith.constant 0 : index
    %0 = vector.load %arg1[%c0, %c0_0] : memref<1x2048xf32, #tpu.memory_space<vmem>>, vector<1x2048xf32>
    %c0_1 = arith.constant 0 : index
    %c0_2 = arith.constant 0 : index
    %1 = vector.load %arg2[%c0_1, %c0_2] : memref<1x2048xf32, #tpu.memory_space<vmem>>, vector<1x2048xf32>
    tpu.vector_store %arg2[%c0_1, %c0_2], %0 {strides = array<i32>} : memref<1x2048xf32, #tpu.memory_space<vmem>>, vector<1x2048xf32>,
    return
  }
  func.func @transform_0(%arg0: i32) -> (i32, i32) {
    %c0_i32 = arith.constant 0 : i32
    %c0_i32_0 = arith.constant 0 : i32
    return %arg0, %c0_i32 : i32, i32
  }
  func.func @transform_1(%arg0: i32) -> (i32, i32) {
    %c0_i32 = arith.constant 0 : i32
    %c0_i32_0 = arith.constant 0 : i32
    return %arg0, %c0_i32 : i32, i32
  }
}

</mosaic_0001>

<llo_original>
// kernel: tpu_custom_call.1
$region0: #{tpu_custom_call.1}
  #allocation0 [shape = 'u32[]', space=smem, size = 0x4, offset = 0x4, fixed_abs, tag = 'smem constant byte address 0x4 - core index']
  #allocation1 [shape = 'u32[144,128]{1,0:T(1,128)}', space=vmem, size = 0x12000, scoped, tag = 'internal scratch']
  %s0 = inlined_call_operand.hbm [shape: f32[1,2048], index: 0, kind: input, shape index: {}]
  %s1 = inlined_call_operand.hbm [shape: f32[1,2048], index: 1, kind: output, shape index: {}]
  %s2 = sld [smem:[#allocation0]]
  $region18: #{tpu_custom_call.1} parent=0
    _
  %s4 = ssub.s32 1, %s2
  %s5 = scalar_select 0, %s4, %s2
  $region1: #{tpu_custom_call.1} parent=0
    #allocation2 [shape = 'u8[8192]{0}', space=vmem, size = 0x2000, scoped, tag = 'input window, operand 0, single buffered']
    #allocation3 [shape = 's32[1]{0}', space=sflag, size = 0x4, scoped, tag = 'scoped memory for tpu_custom_call.1']
    #allocation4 [shape = 's32[1]{0}', space=sflag, size = 0x4, scoped, tag = 'scoped memory for tpu_custom_call.1']
    #allocation5 [shape = 'u8[8192]{0}', space=vmem, size = 0x2000, scoped, tag = 'output window, operand 0, single buffered']
    %6 = vsyncpa [#allocation3], 0
    %7 = vsyncpa [#allocation4], 0
    // Predicated region
    $region2: #{tpu_custom_call.1} parent=1 // pred_check
      _
    $region3: #{tpu_custom_call.1} parent=1 // pred_check_branch
      %9 = sbr.rel (0) target = $region5
    $region4: #{tpu_custom_call.1} parent=1 // pred_region
      %s11 = ssub.s32 256, 256
      %12 = vsyncadd [#allocation3], %s11
      %s14 = sshll.u32 [#allocation2], 4
      %s15 = int_to_ptr.vmem [resolvable:$true] %s14
      %17 = dma.hbm_to_vmem [thread:$0]  %s0, 256, %s15, [#allocation3]
    $region5: #{tpu_custom_call.1} parent=1 // pred_fallthru
      _
    // Predicated region
    $region6: #{tpu_custom_call.1} parent=1 // pred_check
      _
    $region7: #{tpu_custom_call.1} parent=1 // pred_check_branch
      %19 = sbr.rel (0) target = $region9
    $region8: #{tpu_custom_call.1} parent=1 // pred_region
      %20 = dma.done [#allocation3], 256
    $region9: #{tpu_custom_call.1} parent=1 // pred_fallthru
      _
    %v21 = vld [vmem:[#allocation2] sm:$0xff]
    %v22 = vld [vmem:[#allocation2 + $0x8] sm:$0xff]
    %23 = vst [vmem:[#allocation5] sm:$0xff] %v21
    %24 = vst [vmem:[#allocation5 + $0x8] sm:$0xff] %v22
    // Predicated region
    $region10: #{tpu_custom_call.1} parent=1 // pred_check
      _
    $region11: #{tpu_custom_call.1} parent=1 // pred_check_branch
      %26 = sbr.rel (0) target = $region13
    $region12: #{tpu_custom_call.1} parent=1 // pred_region
      %s28 = ssub.s32 256, 256
      %29 = vsyncadd [#allocation4], %s28
      %s31 = sshll.u32 [#allocation5], 4
      %s32 = int_to_ptr.vmem [resolvable:$true] %s31
      %34 = dma.vmem_to_hbm [thread:$0]  %s32, 256, %s1, [#allocation4]
    $region13: #{tpu_custom_call.1} parent=1 // pred_fallthru
      _
    // Predicated region
    $region14: #{tpu_custom_call.1} parent=1 // pred_check
      _
    $region15: #{tpu_custom_call.1} parent=1 // pred_check_branch
      %36 = sbr.rel (0) target = $region17
    $region16: #{tpu_custom_call.1} parent=1 // pred_region
      %37 = dma.done [#allocation4], 256
    $region17: #{tpu_custom_call.1} parent=1 // pred_fallthru
      _
    %38 = vsyncpa [#allocation3], 1
    %39 = vsyncpa [#allocation4], 1

</llo_original>
